<compile_context>
chip_gen: v7x
topology: tpu7x:2x2x1
jax: 0.10.0
libtpu: 0.0.40
codegen_flags: <defaults>
</compile_context>

<pallas_src>
import functools

import jax
import jax.numpy as jnp
from jax.experimental import pallas as pl
from jax.experimental.pallas import tpu as pltpu

MAX_PAR = 2          # leading "parallel" grid axis (exploits 2 TensorCores on v7x)
MAX_TILE_ROWS = 512  # batch-tile rows (multiple of 8); keeps tiles small in VMEM


def _cbm_loss_kernel(cp_ref, yp_ref, yl_ref, out_ref, acc_c, acc_y, *,
                     B, C, TB, tiles_per_chunk, w_c, w_y, needs_mask):
    t = pl.program_id(1)

    @pl.when(t == 0)
    def _init():
        acc_c[...] = jnp.zeros_like(acc_c)
        acc_y[...] = jnp.zeros_like(acc_y)

    # Column split of the label block happens here (static ref slices).
    cdiff = cp_ref[...] - yl_ref[:, :C]          # (TB, C)
    ydiff = yp_ref[...] - yl_ref[:, C:C + 1]     # (TB, 1)
    csq = cdiff * cdiff
    ysq = ydiff * ydiff

    if needs_mask:
        # Mask remainder rows of partial tiles and fully out-of-range (clamped)
        # tiles, based on the *intended* tile index.
        c = pl.program_id(0)
        tile_idx = c * tiles_per_chunk + t
        row0 = tile_idx * TB
        rows = jax.lax.broadcasted_iota(jnp.int32, (TB, 1), 0) + row0
        valid = rows < B
        csq = jnp.where(valid, csq, 0.0)
        ysq = jnp.where(valid, ysq, 0.0)

    # Pure VPU accumulate (hidden under DMA); no per-step cross-lane reduce.
    acc_c[...] += csq
    acc_y[...] += ysq

    @pl.when(t == tiles_per_chunk - 1)
    def _finalize():
        partial = (jnp.float32(w_y) * jnp.sum(acc_y[...])
                   + jnp.float32(w_c) * jnp.sum(acc_c[...]))
        out_ref[...] = jnp.broadcast_to(partial, out_ref.shape).astype(jnp.float32)


def make_cbm_loss(lambda_concept: float = 1.0):
    """Returns a callable (concepts_pred, y_pred, y_label) -> scalar loss."""

    def cbm_loss(concepts_pred, y_pred, y_label):
        concepts_pred = concepts_pred.astype(jnp.float32)
        y_label = y_label.astype(jnp.float32)
        B, C = concepts_pred.shape
        assert y_label.shape == (B, C + 1)
        y_pred2d = y_pred.astype(jnp.float32).reshape(B, 1)   # free, contiguous

        TB = B if B <= MAX_TILE_ROWS else MAX_TILE_ROWS
        total_tiles = pl.cdiv(B, TB)
        num_par = min(MAX_PAR, total_tiles)          # no empty parallel chunks
        tiles_per_chunk = pl.cdiv(total_tiles, num_par)
        max_tile = total_tiles - 1
        needs_mask = (num_par * tiles_per_chunk * TB) != B

        # Static scale constants folded at trace time.
        w_c = float(lambda_concept) / float(B * C)
        w_y = 1.0 / float(B)

        if needs_mask:
            def row_map(c, t):
                # Clamp padded tile indices (only when tile count is padded to
                # num_par * tiles_per_chunk); their contribution is masked to 0.
                return (jnp.minimum(c * tiles_per_chunk + t, max_tile), 0)
        else:
            def row_map(c, t):
                return (c * tiles_per_chunk + t, 0)

        kernel = functools.partial(
            _cbm_loss_kernel, B=B, C=C, TB=TB, tiles_per_chunk=tiles_per_chunk,
            w_c=w_c, w_y=w_y, needs_mask=needs_mask)

        bytes_accessed = 4 * (concepts_pred.size + y_pred2d.size + y_label.size
                              + num_par * 8 * 128)
        cost = pl.CostEstimate(flops=3 * B * (C + 1), transcendentals=0,
                               bytes_accessed=int(bytes_accessed))

        out = pl.pallas_call(
            kernel,
            out_shape=jax.ShapeDtypeStruct((num_par, 8, 128), jnp.float32),
            grid_spec=pltpu.PrefetchScalarGridSpec(
                num_scalar_prefetch=0,
                grid=(num_par, tiles_per_chunk),
                in_specs=[
                    pl.BlockSpec((TB, C), row_map),        # concepts_pred tile
                    pl.BlockSpec((TB, 1), row_map),        # y_pred tile
                    pl.BlockSpec((TB, C + 1), row_map),    # whole label tile
                ],
                out_specs=pl.BlockSpec((1, 8, 128), lambda c, t: (c, 0, 0)),
                scratch_shapes=[
                    pltpu.VMEM((TB, C), jnp.float32),      # concept sq-diff acc
                    pltpu.VMEM((TB, 1), jnp.float32),      # target sq-diff acc
                ],
            ),
            compiler_params=pltpu.CompilerParams(
                dimension_semantics=("parallel", "arbitrary")),
            cost_estimate=cost,
        )(concepts_pred, y_pred2d, y_label)

        # Combine the per-chunk partial losses (<= num_par scalars).
        return out[:, 0, 0].sum()

    return cbm_loss


if __name__ == "__main__":
    lambda_concept = 1.0
    loss_fn = jax.jit(make_cbm_loss(lambda_concept))

    def ref_loss(cp, yp, yl):
        return (jnp.mean((yp - yl[:, -1]) ** 2)
                + lambda_concept * jnp.mean((cp - yl[:, :-1]) ** 2))

    # Small case (matches the module's expected shapes) + a larger case that
    # exercises multi-tile accumulation, the parallel split and row masking.
    for (B, C) in [(8, 4), (1100, 5)]:
        key = jax.random.PRNGKey(0)
        k1, k2, k3 = jax.random.split(key, 3)
        concepts_pred = jax.random.normal(k1, (B, C), dtype=jnp.float32)
        y_pred = jax.random.normal(k2, (B,), dtype=jnp.float32)
        y_label = jax.random.normal(k3, (B, C + 1), dtype=jnp.float32)

        loss = jax.block_until_ready(loss_fn(concepts_pred, y_pred, y_label))
        ref = ref_loss(concepts_pred, y_pred, y_label)
        assert jnp.allclose(loss, ref, rtol=2e-5, atol=1e-5), (B, C, loss, ref)

    print("KERNEL_OK")
</pallas_src>

<mosaic_0001>
module attributes {stable_mosaic.version = 11 : i64} {
  func.func @_cbm_loss_kernel(%arg0: i32, %arg1: i32, %arg2: memref<8x4xf32, #tpu.memory_space<vmem>>, %arg3: memref<8x1xf32, #tpu.memory_space<vmem>>, %arg4: memref<8x5xf32, #tpu.memory_space<vmem>>, %arg5: memref<1x8x128xf32, #tpu.memory_space<vmem>>, %arg6: memref<8x4xf32, #tpu.memory_space<vmem>>, %arg7: memref<8x1xf32, #tpu.memory_space<vmem>>) attributes {dimension_semantics = [#tpu.dimension_semantics<parallel>, #tpu.dimension_semantics<arbitrary>], iteration_bounds = array<i64: 1, 1>, scalar_prefetch = 0 : i64, scratch_operands = 2 : i64, tpu.core_type = #tpu.core_type<tc>, window_params = [{transform_indices = @transform_0, window_bounds = array<i64: 8, 4>}, {transform_indices = @transform_1, window_bounds = array<i64: 8, 1>}, {transform_indices = @transform_2, window_bounds = array<i64: 8, 5>}, {transform_indices = @transform_3, window_bounds = array<i64: 1, 8, 128>}]} {
    %c0_i32 = arith.constant 0 : i32
    %0 = arith.cmpi eq, %arg1, %c0_i32 : i32
    %1 = arith.extui %0 : i1 to i32
    %c0_i32_0 = arith.constant 0 : i32
    %2 = arith.cmpi ne, %1, %c0_i32_0 : i32
    scf.if %2 {
      %cst = arith.constant 0.000000e+00 : f32
      %20 = vector.broadcast %cst : f32 to vector<8x4xf32>
      %c0_17 = arith.constant 0 : index
      %c0_18 = arith.constant 0 : index
      %21 = vector.load %arg6[%c0_17, %c0_18] : memref<8x4xf32, #tpu.memory_space<vmem>>, vector<8x4xf32>
      tpu.vector_store %arg6[%c0_17, %c0_18], %20 {strides = array<i32>} : memref<8x4xf32, #tpu.memory_space<vmem>>, vector<8x4xf32>,
      %cst_19 = arith.constant 0.000000e+00 : f32
      %22 = vector.broadcast %cst_19 : f32 to vector<8x1xf32>
      %c0_20 = arith.constant 0 : index
      %c0_21 = arith.constant 0 : index
      %23 = vector.load %arg7[%c0_20, %c0_21] : memref<8x1xf32, #tpu.memory_space<vmem>>, vector<8x1xf32>
      tpu.vector_store %arg7[%c0_20, %c0_21], %22 {strides = array<i32>} : memref<8x1xf32, #tpu.memory_space<vmem>>, vector<8x1xf32>,
    } else {
    }
    %c0 = arith.constant 0 : index
    %c0_1 = arith.constant 0 : index
    %3 = vector.load %arg2[%c0, %c0_1] : memref<8x4xf32, #tpu.memory_space<vmem>>, vector<8x4xf32>
    %c0_2 = arith.constant 0 : index
    %c0_3 = arith.constant 0 : index
    %4 = vector.load %arg4[%c0_2, %c0_3] : memref<8x5xf32, #tpu.memory_space<vmem>>, vector<8x4xf32>
    %5 = arith.subf %3, %4 : vector<8x4xf32>
    %c0_4 = arith.constant 0 : index
    %c0_5 = arith.constant 0 : index
    %6 = vector.load %arg3[%c0_4, %c0_5] : memref<8x1xf32, #tpu.memory_space<vmem>>, vector<8x1xf32>
    %c0_6 = arith.constant 0 : index
    %c4 = arith.constant 4 : index
    %7 = vector.load %arg4[%c0_6, %c4] : memref<8x5xf32, #tpu.memory_space<vmem>>, vector<8x1xf32>
    %8 = arith.subf %6, %7 : vector<8x1xf32>
    %9 = arith.mulf %5, %5 : vector<8x4xf32>
    %10 = arith.mulf %8, %8 : vector<8x1xf32>
    %c0_7 = arith.constant 0 : index
    %c0_8 = arith.constant 0 : index
    %11 = vector.load %arg6[%c0_7, %c0_8] : memref<8x4xf32, #tpu.memory_space<vmem>>, vector<8x4xf32>
    %12 = arith.addf %11, %9 : vector<8x4xf32>
    %c0_9 = arith.constant 0 : index
    %c0_10 = arith.constant 0 : index
    %13 = vector.load %arg6[%c0_9, %c0_10] : memref<8x4xf32, #tpu.memory_space<vmem>>, vector<8x4xf32>
    tpu.vector_store %arg6[%c0_9, %c0_10], %12 {strides = array<i32>} : memref<8x4xf32, #tpu.memory_space<vmem>>, vector<8x4xf32>,
    %c0_11 = arith.constant 0 : index
    %c0_12 = arith.constant 0 : index
    %14 = vector.load %arg7[%c0_11, %c0_12] : memref<8x1xf32, #tpu.memory_space<vmem>>, vector<8x1xf32>
    %15 = arith.addf %14, %10 : vector<8x1xf32>
    %c0_13 = arith.constant 0 : index
    %c0_14 = arith.constant 0 : index
    %16 = vector.load %arg7[%c0_13, %c0_14] : memref<8x1xf32, #tpu.memory_space<vmem>>, vector<8x1xf32>
    tpu.vector_store %arg7[%c0_13, %c0_14], %15 {strides = array<i32>} : memref<8x1xf32, #tpu.memory_space<vmem>>, vector<8x1xf32>,
    %c0_i32_15 = arith.constant 0 : i32
    %17 = arith.cmpi eq, %arg1, %c0_i32_15 : i32
    %18 = arith.extui %17 : i1 to i32
    %c0_i32_16 = arith.constant 0 : i32
    %19 = arith.cmpi ne, %18, %c0_i32_16 : i32
    scf.if %19 {
      %c0_17 = arith.constant 0 : index
      %c0_18 = arith.constant 0 : index
      %20 = vector.load %arg7[%c0_17, %c0_18] : memref<8x1xf32, #tpu.memory_space<vmem>>, vector<8x1xf32>
      %21 = vector.shape_cast %20 : vector<8x1xf32> to vector<1x8x1xf32>
      %cst = arith.constant dense<0.000000e+00> : vector<1xf32>
      %22 = vector.multi_reduction <add>, %21, %cst [1, 2] : vector<1x8x1xf32> to vector<1xf32>
      %23 = vector.shape_cast %22 : vector<1xf32> to vector<1x1x1xf32>
      %24 = vector.extract %23[0, 0, 0] : f32 from vector<1x1x1xf32>
      %cst_19 = arith.constant 1.250000e-01 : f32
      %25 = arith.mulf %cst_19, %24 : f32
      %c0_20 = arith.constant 0 : index
      %c0_21 = arith.constant 0 : index
      %26 = vector.load %arg6[%c0_20, %c0_21] : memref<8x4xf32, #tpu.memory_space<vmem>>, vector<8x4xf32>
      %27 = vector.shape_cast %26 : vector<8x4xf32> to vector<1x8x4xf32>
      %cst_22 = arith.constant dense<0.000000e+00> : vector<1xf32>
      %28 = vector.multi_reduction <add>, %27, %cst_22 [1, 2] : vector<1x8x4xf32> to vector<1xf32>
      %29 = vector.shape_cast %28 : vector<1xf32> to vector<1x1x1xf32>
      %30 = vector.extract %29[0, 0, 0] : f32 from vector<1x1x1xf32>
      %cst_23 = arith.constant 3.125000e-02 : f32
      %31 = arith.mulf %cst_23, %30 : f32
      %32 = arith.addf %25, %31 : f32
      %33 = vector.broadcast %32 : f32 to vector<1x8x128xf32>
      %c0_24 = arith.constant 0 : index
      %c0_25 = arith.constant 0 : index
      %c0_26 = arith.constant 0 : index
      %34 = vector.load %arg5[%c0_24, %c0_25, %c0_26] : memref<1x8x128xf32, #tpu.memory_space<vmem>>, vector<1x8x128xf32>
      tpu.vector_store %arg5[%c0_24, %c0_25, %c0_26], %33 {strides = array<i32>} : memref<1x8x128xf32, #tpu.memory_space<vmem>>, vector<1x8x128xf32>,
    } else {
    }
    return
  }
  func.func @transform_0(%arg0: i32, %arg1: i32) -> (i32, i32) {
    %c1_i32 = arith.constant 1 : i32
    %0 = arith.muli %arg0, %c1_i32 : i32
    %1 = arith.addi %0, %arg1 : i32
    %c0_i32 = arith.constant 0 : i32
    %c0_i32_0 = arith.constant 0 : i32
    return %1, %c0_i32 : i32, i32
  }
  func.func @transform_1(%arg0: i32, %arg1: i32) -> (i32, i32) {
    %c1_i32 = arith.constant 1 : i32
    %0 = arith.muli %arg0, %c1_i32 : i32
    %1 = arith.addi %0, %arg1 : i32
    %c0_i32 = arith.constant 0 : i32
    %c0_i32_0 = arith.constant 0 : i32
    return %1, %c0_i32 : i32, i32
  }
  func.func @transform_2(%arg0: i32, %arg1: i32) -> (i32, i32) {
    %c1_i32 = arith.constant 1 : i32
    %0 = arith.muli %arg0, %c1_i32 : i32
    %1 = arith.addi %0, %arg1 : i32
    %c0_i32 = arith.constant 0 : i32
    %c0_i32_0 = arith.constant 0 : i32
    return %1, %c0_i32 : i32, i32
  }
  func.func @transform_3(%arg0: i32, %arg1: i32) -> (i32, i32, i32) {
    %c0_i32 = arith.constant 0 : i32
    %c0_i32_0 = arith.constant 0 : i32
    %c0_i32_1 = arith.constant 0 : i32
    return %arg0, %c0_i32, %c0_i32_0 : i32, i32, i32
  }
}

</mosaic_0001>

<llo_original>
// kernel: cbm_loss.1
$region0: #{cbm_loss.1}
  #allocation0 [shape = 'u32[]', space=smem, size = 0x4, offset = 0x4, fixed_abs, tag = 'smem constant byte address 0x4 - core index']
  #allocation1 [shape = 'u32[144,128]{1,0:T(1,128)}', space=vmem, size = 0x12000, scoped, tag = 'internal scratch']
  #allocation2 [shape = 'f32[8,4]{1,0:T(8,128)}', space=vmem, size = 0x1000, scoped, tag = 'scratch operand']
  #allocation3 [shape = 'f32[8,1]{1,0:T(8,128)}', space=vmem, size = 0x1000, scoped, tag = 'scratch operand']
  %s0 = inlined_call_operand.vmem [shape: f32[8,4], index: 0, kind: input, shape index: {}]
  %s1 = inlined_call_operand.vmem [shape: f32[8,1], index: 1, kind: input, shape index: {}]
  %s2 = inlined_call_operand.vmem [shape: f32[8,5], index: 2, kind: input, shape index: {}]
  %s3 = inlined_call_operand.vmem [shape: f32[1,8,128], index: 3, kind: output, shape index: {}]
  %s4 = sld [smem:[#allocation0]]
  $region30: #{cbm_loss.1} parent=0
    _
  %s6 = ssub.s32 1, %s4
  %s7 = scalar_select 0, %s6, %s4
  // Predicated region
  $region2: #{cbm_loss.1} parent=0 // pred_check
    _
  $region3: #{cbm_loss.1} parent=0 // pred_check_branch
    %9 = sbr.rel (0) target = $region5
  $region4: #{cbm_loss.1} parent=0 // pred_region
    %s10 = sadd.s32 0, 0
    %p11 = scmp.lt.s32.totalorder %s10, 0
    %s12 = scalar_select %p11, %s10, 0
    %s13 = smul.addr %s12, 8
    %s14 = scalar_lea.vmem %s0, %s13
    %s15 = sadd.s32 0, 0
  $region5: #{cbm_loss.1} parent=0 // pred_fallthru
    _
  // Predicated region
  $region6: #{cbm_loss.1} parent=0 // pred_check
    _
  $region7: #{cbm_loss.1} parent=0 // pred_check_branch
    %17 = sbr.rel (0) target = $region9
  $region8: #{cbm_loss.1} parent=0 // pred_region
    %s18 = sadd.s32 0, 0
    %p19 = scmp.lt.s32.totalorder %s18, 0
    %s20 = scalar_select %p19, %s18, 0
    %s21 = smul.addr %s20, 8
    %s22 = scalar_lea.vmem %s1, %s21
    %s23 = sadd.s32 0, 0
  $region9: #{cbm_loss.1} parent=0 // pred_fallthru
    _
  // Predicated region
  $region10: #{cbm_loss.1} parent=0 // pred_check
    _
  $region11: #{cbm_loss.1} parent=0 // pred_check_branch
    %25 = sbr.rel (0) target = $region13
  $region12: #{cbm_loss.1} parent=0 // pred_region
    %s26 = sadd.s32 0, 0
    %p27 = scmp.lt.s32.totalorder %s26, 0
    %s28 = scalar_select %p27, %s26, 0
    %s29 = smul.addr %s28, 8
    %s30 = scalar_lea.vmem %s2, %s29
    %s31 = sadd.s32 0, 0
  $region13: #{cbm_loss.1} parent=0 // pred_fallthru
    _
  %s32 = sadd.s32 0, 0
  %p33 = scmp.lt.s32.totalorder %s32, 0
  %s34 = scalar_select %p33, %s32, 0
  %s35 = smul.addr %s34, 8
  %s36 = scalar_lea.vmem %s0, %s35
  %s37 = sadd.s32 0, 0
  %p38 = scmp.lt.s32.totalorder %s37, 0
  %s39 = scalar_select %p38, %s37, 0
  %s40 = smul.addr %s39, 8
  %s41 = scalar_lea.vmem %s1, %s40
  %s42 = sadd.s32 0, 0
  %p43 = scmp.lt.s32.totalorder %s42, 0
  %s44 = scalar_select %p43, %s42, 0
  %s45 = smul.addr %s44, 8
  %s46 = scalar_lea.vmem %s2, %s45
  %s47 = sadd.s32 0, 0
  %p48 = scmp.lt.s32.totalorder %s47, 0
  %s49 = scalar_select %p48, %s47, 0
  %s50 = smul.addr %s49, 8
  %s51 = scalar_lea.vmem %s0, %s50
  %s52 = sadd.s32 0, 0
  %s53 = sadd.s32 0, 0
  %p54 = scmp.lt.s32.totalorder %s53, 0
  %s55 = scalar_select %p54, %s53, 0
  %s56 = smul.addr %s55, 8
  %s57 = scalar_lea.vmem %s1, %s56
  %s58 = sadd.s32 0, 0
  %s59 = sadd.s32 0, 0
  %p60 = scmp.lt.s32.totalorder %s59, 0
  %s61 = scalar_select %p60, %s59, 0
  %s62 = smul.addr %s61, 8
  %s63 = scalar_lea.vmem %s2, %s62
  %s64 = sadd.s32 0, 0
  %p65 = scmp.eq.s32.totalorder 0, 0
  // Predicated region
  $region14: #{cbm_loss.1} parent=0 // pred_check
    %p66 = pneg %p65
  $region15: #{cbm_loss.1} parent=0 // pred_check_branch
    %68 = sbr.rel (%p66) target = $region17
  $region16: #{cbm_loss.1} parent=0 // pred_region
    %vm69 = vcmask 31744
    %70 = vst.msk [vmem:[#allocation2] sm:$0xff] %vm69, 0.0
    %vm71 = vcmask 7168
    %72 = vst.msk [vmem:[#allocation3] sm:$0xff] %vm71, 0.0
  $region17: #{cbm_loss.1} parent=0 // pred_fallthru
    _
  %v73 = vld [vmem:[%s51] sm:$0xff]
  %v74 = vld [vmem:[%s63] sm:$0xff]
  %v75 = vsub.f32 %v73, %v74
  %v76 = vld [vmem:[%s57] sm:$0xff]
  %78 = vrot.lane.b32.xlu0 %v74, 124
  %v79 = vpop.permute.xlu0 %78
  %v81 = vsub.f32 %v76, %v79
  %v82 = vmul.f32 %v75, %v75
  %v83 = vmul.f32 %v81, %v81
  %v84 = vld [vmem:[#allocation2] sm:$0xff]
  %v85 = vadd.f32 %v84, %v82
  %vm86 = vcmask 31744
  %87 = vst.msk [vmem:[#allocation2] sm:$0xff] %vm86, %v85
  %v88 = vld [vmem:[#allocation3] sm:$0xff]
  %v89 = vadd.f32 %v88, %v83
  %vm90 = vcmask 7168
  %91 = vst.msk [vmem:[#allocation3] sm:$0xff] %vm90, %v89
  // Predicated region
  $region18: #{cbm_loss.1} parent=0 // pred_check
    %p92 = pneg %p65
  $region19: #{cbm_loss.1} parent=0 // pred_check_branch
    %94 = sbr.rel (%p92) target = $region21
  $region20: #{cbm_loss.1} parent=0 // pred_region
    %v95 = vld [vmem:[#allocation3] sm:$0xff]
    %v96 = vsel %vm90, %v95, 0.0
    %97 = vadd.xlane.f32.xlu0 %v96
    %v98 = vpop.xlane.xlu0 %97
    %v99 = vrot.slane %v98, 4
    %v100 = vadd.f32 %v98, %v99
    %v101 = vrot.slane %v100, 2
    %v102 = vadd.f32 %v100, %v101
    %v103 = vrot.slane %v102, 1
    %v104 = vadd.f32 %v102, %v103
    %s105 = vtos %v104
    %s106 = smul.f32 %s105, 0.125
    %v107 = vld [vmem:[#allocation2] sm:$0xff]
    %v108 = vsel %vm86, %v107, 0.0
    %109 = vadd.xlane.f32.xlu0 %v108
    %v110 = vpop.xlane.xlu0 %109
    %v111 = vrot.slane %v110, 4
    %v112 = vadd.f32 %v110, %v111
    %v113 = vrot.slane %v112, 2
    %v114 = vadd.f32 %v112, %v113
    %v115 = vrot.slane %v114, 1
    %v116 = vadd.f32 %v114, %v115
    %s117 = vtos %v116
    %s118 = smul.f32 %s117, 0.03125
    %s119 = sadd.f32 %s106, %s118
    %v120 = vstv %s119
    %121 = vst [vmem:[%s3] sm:$0xff] %v120
  $region21: #{cbm_loss.1} parent=0 // pred_fallthru
    _
  // Predicated region
  $region22: #{cbm_loss.1} parent=0 // pred_check
    _
  $region23: #{cbm_loss.1} parent=0 // pred_check_branch
    %123 = sbr.rel (0) target = $region25
  $region24: #{cbm_loss.1} parent=0 // pred_region
    _
  $region25: #{cbm_loss.1} parent=0 // pred_fallthru
    _
  // Predicated region
  $region26: #{cbm_loss.1} parent=0 // pred_check
    _
  $region27: #{cbm_loss.1} parent=0 // pred_check_branch
    %125 = sbr.rel (0) target = $region29
  $region28: #{cbm_loss.1} parent=0 // pred_region
    _
  $region29: #{cbm_loss.1} parent=0 // pred_fallthru
    _

</llo_original>
